<compile_context>
chip_gen: v7x
topology: tpu7x:2x2x1
jax: 0.10.0
libtpu: 0.0.40
codegen_flags: <defaults>
</compile_context>

<pallas_src>
import jax
import jax.numpy as jnp
from jax import lax
from jax.experimental import pallas as pl
from jax.experimental.pallas import tpu as pltpu


def _tactic_predictor_kernel(x_ref, w_ref, b_ref, o_ref):
    # x_ref: (TB, D), w_ref: (2, D) [PyTorch nn.Linear layout], b_ref: (1, 2),
    # o_ref: (TB, 2).
    x = x_ref[...].astype(jnp.float32)          # (TB, D)
    w = w_ref[...].astype(jnp.float32)          # (2, D)
    b = b_ref[...].astype(jnp.float32)          # (1, 2)

    # softmax over 2 classes == sigmoid of the logit difference.
    wd = w[0:1, :] - w[1:2, :]                  # (1, D)   VPU subtract (tiny)
    db = b[:, 0:1] - b[:, 1:2]                  # (1, 1)   VPU subtract (tiny)
    # One broadcast-multiply + one lane reduce (XLU) instead of an MXU matmul.
    d = jnp.sum(x * wd, axis=-1, keepdims=True) + db        # (TB, 1)
    # p0 = sigmoid(d) = 1 / (1 + exp(-d)); exp on the EUP, approximate
    # reciprocal on the EUP vrcp slot (effectively free, off the VALU path).
    p0 = pl.reciprocal(1.0 + jnp.exp(-d), approx=True)       # (TB, 1)
    p1 = 1.0 - p0                                             # rows sum to 1 exactly

    # Single full-block store: select p0 / p1 per output lane (lane broadcast +
    # VPU select), instead of two separate single-lane masked stores.
    lane = lax.broadcasted_iota(jnp.int32, o_ref.shape, 1)   # (TB, 2)
    o_ref[...] = jnp.where(lane == 0, p0, p1).astype(o_ref.dtype)


def tactic_predictor_forward(goal_embeddings, weight, bias, *, block_batch=1024):
    """goal_embeddings: (B, D); weight: (2, D) (PyTorch nn.Linear layout); bias: (2,).

    Returns softmax(goal_embeddings @ weight.T + bias, axis=1) as (B, 2) f32.
    """
    B, D = goal_embeddings.shape
    assert weight.shape == (2, D), weight.shape
    assert bias.shape == (2,), bias.shape

    bias2d = bias.reshape(1, 2)  # metadata-only reshape of 2 elements

    # Batch tile: full batch for small B (block == full array dim is always
    # legal), else a fixed multiple-of-8 tile that stays well inside VMEM
    # (2 buffers x TB*D*4B = 256 KiB @ TB=1024, D=32).
    tb = B if B <= block_batch else block_batch
    grid = (pl.cdiv(B, tb),)

    return pl.pallas_call(
        _tactic_predictor_kernel,
        out_shape=jax.ShapeDtypeStruct((B, 2), jnp.float32),
        grid=grid,
        in_specs=[
            # Batch-tiled, double-buffered by the Pallas pipeline.
            pl.BlockSpec((tb, D), lambda i: (i, 0)),
            # Weight / bias: full-array blocks, resident across all grid steps.
            pl.BlockSpec((2, D), lambda i: (0, 0)),
            pl.BlockSpec((1, 2), lambda i: (0, 0)),
        ],
        out_specs=pl.BlockSpec((tb, 2), lambda i: (i, 0)),
        compiler_params=pltpu.CompilerParams(
            # Batch axis is embarrassingly parallel -> megacore sharding on v7x.
            dimension_semantics=("parallel",),
        ),
    )(goal_embeddings, weight, bias2d)


def reference_forward(goal_embeddings, weight, bias):
    logits = goal_embeddings @ weight.T + bias
    return jax.nn.softmax(logits, axis=1)


if __name__ == "__main__":
    key = jax.random.PRNGKey(0)
    k_x, k_w, k_b, k_x2 = jax.random.split(key, 4)

    # Small shapes consistent with the module: batch=8, term_embedding_dim=32.
    B, D = 8, 32
    goal_embeddings = jax.random.normal(k_x, (B, D), dtype=jnp.float32)
    weight = jax.random.normal(k_w, (2, D), dtype=jnp.float32) * 0.1   # nn.Linear weight (2, D)
    bias = jax.random.normal(k_b, (2,), dtype=jnp.float32) * 0.1       # nn.Linear bias (2,)

    out = jax.block_until_ready(tactic_predictor_forward(goal_embeddings, weight, bias))
    ref = reference_forward(goal_embeddings, weight, bias)
    assert out.shape == (B, 2)
    # Tolerance accommodates the approximate EUP reciprocal (vrcp) in the kernel.
    assert jnp.allclose(out, ref, atol=5e-3, rtol=5e-3)
    assert jnp.allclose(jnp.sum(out, axis=1), 1.0, atol=1e-6)

    # Exercise the multi-block, pipelined grid path (4 batch tiles of 1024).
    B2 = 4096
    goal_big = jax.random.normal(k_x2, (B2, D), dtype=jnp.float32)
    out_big = jax.block_until_ready(tactic_predictor_forward(goal_big, weight, bias))
    ref_big = reference_forward(goal_big, weight, bias)
    assert out_big.shape == (B2, 2)
    assert jnp.allclose(out_big, ref_big, atol=5e-3, rtol=5e-3)
    assert jnp.allclose(jnp.sum(out_big, axis=1), 1.0, atol=1e-6)

    print("KERNEL_OK")
</pallas_src>

<mosaic_0001>
module attributes {stable_mosaic.version = 11 : i64} {
  func.func @_tactic_predictor_kernel(%arg0: i32, %arg1: memref<8x32xf32, #tpu.memory_space<vmem>>, %arg2: memref<2x32xf32, #tpu.memory_space<vmem>>, %arg3: memref<1x2xf32, #tpu.memory_space<vmem>>, %arg4: memref<8x2xf32, #tpu.memory_space<vmem>>) attributes {dimension_semantics = [#tpu.dimension_semantics<parallel>], iteration_bounds = array<i64: 1>, scalar_prefetch = 0 : i64, scratch_operands = 0 : i64, tpu.core_type = #tpu.core_type<tc>, window_params = [{transform_indices = @transform_0, window_bounds = array<i64: 8, 32>}, {pipeline_mode = #tpu.pipeline_mode<synchronous>, transform_indices = @transform_1, window_bounds = array<i64: 2, 32>}, {pipeline_mode = #tpu.pipeline_mode<synchronous>, transform_indices = @transform_2, window_bounds = array<i64: 1, 2>}, {transform_indices = @transform_3, window_bounds = array<i64: 8, 2>}]} {
    %c0 = arith.constant 0 : index
    %c0_0 = arith.constant 0 : index
    %0 = vector.load %arg1[%c0, %c0_0] : memref<8x32xf32, #tpu.memory_space<vmem>>, vector<8x32xf32>
    %c0_1 = arith.constant 0 : index
    %c0_2 = arith.constant 0 : index
    %1 = vector.load %arg2[%c0_1, %c0_2] : memref<2x32xf32, #tpu.memory_space<vmem>>, vector<2x32xf32>
    %c0_3 = arith.constant 0 : index
    %c0_4 = arith.constant 0 : index
    %2 = vector.load %arg3[%c0_3, %c0_4] : memref<1x2xf32, #tpu.memory_space<vmem>>, vector<1x2xf32>
    %3 = vector.extract_strided_slice %1 {offsets = [0, 0], sizes = [1, 32], strides = [1, 1]} : vector<2x32xf32> to vector<1x32xf32>
    %4 = vector.extract_strided_slice %1 {offsets = [1, 0], sizes = [1, 32], strides = [1, 1]} : vector<2x32xf32> to vector<1x32xf32>
    %5 = arith.subf %3, %4 : vector<1x32xf32>
    %6 = vector.extract_strided_slice %2 {offsets = [0, 0], sizes = [1, 1], strides = [1, 1]} : vector<1x2xf32> to vector<1x1xf32>
    %7 = vector.extract_strided_slice %2 {offsets = [0, 1], sizes = [1, 1], strides = [1, 1]} : vector<1x2xf32> to vector<1x1xf32>
    %8 = arith.subf %6, %7 : vector<1x1xf32>
    %9 = vector.broadcast %5 : vector<1x32xf32> to vector<8x32xf32>
    %10 = arith.mulf %0, %9 : vector<8x32xf32>
    %cst = arith.constant dense<0.000000e+00> : vector<8xf32>
    %11 = vector.multi_reduction <add>, %10, %cst [1] : vector<8x32xf32> to vector<8xf32>
    %12 = vector.shape_cast %11 : vector<8xf32> to vector<8x1xf32>
    %13 = vector.broadcast %8 : vector<1x1xf32> to vector<8x1xf32>
    %14 = arith.addf %12, %13 : vector<8x1xf32>
    %cst_5 = arith.constant 0.000000e+00 : f32
    %15 = vector.broadcast %cst_5 : f32 to vector<8x1xf32>
    %16 = arith.subf %15, %14 : vector<8x1xf32>
    %17 = math.exp %16 : vector<8x1xf32>
    %cst_6 = arith.constant 1.000000e+00 : f32
    %18 = vector.broadcast %cst_6 : f32 to vector<8x1xf32>
    %19 = arith.addf %18, %17 : vector<8x1xf32>
    %20 = tpu.reciprocal %19 {approx = true} : vector<8x1xf32> -> vector<8x1xf32>
    %cst_7 = arith.constant 1.000000e+00 : f32
    %21 = vector.broadcast %cst_7 : f32 to vector<8x1xf32>
    %22 = arith.subf %21, %20 : vector<8x1xf32>
    %23 = tpu.iota {dimensions = array<i32: 1>} : vector<8x2xi32>
    %c0_i32 = arith.constant 0 : i32
    %24 = vector.broadcast %c0_i32 : i32 to vector<8x2xi32>
    %25 = arith.cmpi eq, %23, %24 : vector<8x2xi32>
    %26 = vector.shape_cast %20 : vector<8x1xf32> to vector<8x1xf32>
    %27 = vector.broadcast %26 : vector<8x1xf32> to vector<8x2xf32>
    %28 = vector.shape_cast %22 : vector<8x1xf32> to vector<8x1xf32>
    %29 = vector.broadcast %28 : vector<8x1xf32> to vector<8x2xf32>
    %30 = arith.select %25, %27, %29 : vector<8x2xi1>, vector<8x2xf32>
    %c0_8 = arith.constant 0 : index
    %c0_9 = arith.constant 0 : index
    %31 = vector.load %arg4[%c0_8, %c0_9] : memref<8x2xf32, #tpu.memory_space<vmem>>, vector<8x2xf32>
    tpu.vector_store %arg4[%c0_8, %c0_9], %30 {strides = array<i32>} : memref<8x2xf32, #tpu.memory_space<vmem>>, vector<8x2xf32>,
    return
  }
  func.func @transform_0(%arg0: i32) -> (i32, i32) {
    %c0_i32 = arith.constant 0 : i32
    %c0_i32_0 = arith.constant 0 : i32
    return %arg0, %c0_i32 : i32, i32
  }
  func.func @transform_1(%arg0: i32) -> (i32, i32) {
    %c0_i32 = arith.constant 0 : i32
    %c0_i32_0 = arith.constant 0 : i32
    %c0_i32_1 = arith.constant 0 : i32
    return %c0_i32, %c0_i32_0 : i32, i32
  }
  func.func @transform_2(%arg0: i32) -> (i32, i32) {
    %c0_i32 = arith.constant 0 : i32
    %c0_i32_0 = arith.constant 0 : i32
    %c0_i32_1 = arith.constant 0 : i32
    return %c0_i32, %c0_i32_0 : i32, i32
  }
  func.func @transform_3(%arg0: i32) -> (i32, i32) {
    %c0_i32 = arith.constant 0 : i32
    %c0_i32_0 = arith.constant 0 : i32
    return %arg0, %c0_i32 : i32, i32
  }
}

</mosaic_0001>

<llo_original>
// kernel: tpu_custom_call.1
$region0: #{tpu_custom_call.1}
  #allocation0 [shape = 'u32[]', space=smem, size = 0x4, offset = 0x4, fixed_abs, tag = 'smem constant byte address 0x4 - core index']
  #allocation1 [shape = 'u32[144,128]{1,0:T(1,128)}', space=vmem, size = 0x12000, scoped, tag = 'internal scratch']
  %s0 = inlined_call_operand.hbm [shape: f32[8,32], index: 0, kind: input, shape index: {}]
  %s1 = inlined_call_operand.vmem [shape: f32[2,32], index: 1, kind: input, shape index: {}]
  %s2 = inlined_call_operand.vmem [shape: f32[1,2], index: 2, kind: input, shape index: {}]
  %s3 = inlined_call_operand.vmem [shape: f32[8,2], index: 3, kind: output, shape index: {}]
  %s4 = sld [smem:[#allocation0]]
  $region26: #{tpu_custom_call.1} parent=0
    _
  %s6 = ssub.s32 1, %s4
  %s7 = scalar_select 0, %s6, %s4
  $region1: #{tpu_custom_call.1} parent=0
    #allocation2 [shape = 'u8[4096]{0}', space=vmem, size = 0x1000, scoped, tag = 'input window, operand 0, single buffered']
    #allocation3 [shape = 's32[1]{0}', space=sflag, size = 0x4, scoped, tag = 'scoped memory for tpu_custom_call.1']
    %8 = vsyncpa [#allocation3], 0
    // Predicated region
    $region2: #{tpu_custom_call.1} parent=1 // pred_check
      _
    $region3: #{tpu_custom_call.1} parent=1 // pred_check_branch
      %10 = sbr.rel (0) target = $region5
    $region4: #{tpu_custom_call.1} parent=1 // pred_region
      %s12 = ssub.s32 128, 128
      %13 = vsyncadd [#allocation3], %s12
      %s15 = sshll.u32 [#allocation2], 4
      %s16 = int_to_ptr.vmem [resolvable:$true] %s15
      %18 = dma.hbm_to_vmem [thread:$0]  %s0, 128, %s16, [#allocation3]
    $region5: #{tpu_custom_call.1} parent=1 // pred_fallthru
      _
    // Predicated region
    $region6: #{tpu_custom_call.1} parent=1 // pred_check
      _
    $region7: #{tpu_custom_call.1} parent=1 // pred_check_branch
      %20 = sbr.rel (0) target = $region9
    $region8: #{tpu_custom_call.1} parent=1 // pred_region
      _
    $region9: #{tpu_custom_call.1} parent=1 // pred_fallthru
      _
    // Predicated region
    $region10: #{tpu_custom_call.1} parent=1 // pred_check
      _
    $region11: #{tpu_custom_call.1} parent=1 // pred_check_branch
      %22 = sbr.rel (0) target = $region13
    $region12: #{tpu_custom_call.1} parent=1 // pred_region
      _
    $region13: #{tpu_custom_call.1} parent=1 // pred_fallthru
      _
    // Predicated region
    $region14: #{tpu_custom_call.1} parent=1 // pred_check
      _
    $region15: #{tpu_custom_call.1} parent=1 // pred_check_branch
      %24 = sbr.rel (0) target = $region17
    $region16: #{tpu_custom_call.1} parent=1 // pred_region
      %25 = dma.done [#allocation3], 128
    $region17: #{tpu_custom_call.1} parent=1 // pred_fallthru
      _
    %v26 = vld [vmem:[#allocation2] sm:$0xff]
    %v27 = vld [vmem:[%s1] sm:$0x3]
    %v28 = vld [vmem:[%s2] sm:$0x1]
    %v30 = vrot.slane %v27, 1
    %v32 = vsub.f32 %v27, %v30
    %34 = vrot.lane.b32.xlu0 %v28, 127
    %v35 = vpop.permute.xlu0 %34
    %v37 = vsub.f32 %v28, %v35
    %v38 = vlaneseq
    %v39 = vshrl.u32 %v38, 7
    %v40 = vsub.s32 0, %v39
    %v41 = vrot.slane %v32, %v40
    %v42 = vmul.f32 %v26, %v41
    %vm43 = vcmask 261120
    %v44 = vsel %vm43, %v42, 0.0
    %45 = vadd.xlane.f32.xlu0 %v44
    %v46 = vpop.xlane.xlu0 %45
    %v48 = vlaneseq
    %v49 = vshrl.u32 %v48, 7
    %v50 = vsub.s32 0, %v49
    %v51 = vrot.slane %v37, %v50
    %v53 = vadd.f32 %v46, %v51
    %v54 = vsub.f32 0.0, %v53
    %v55 = vmul.f32 %v54, 1.442695
    %v56 = vpow.pop %v55
    %v57 = vadd.f32 %v56, 1.0
    %v58 = vrcp.pop %v57
    %v59 = vsub.f32 1.0, %v58
    %v60 = vlaneseq
    %v61 = vand.u32 %v60, 127
    %vm62 = vcmp.eq.s32.totalorder %v61, 0
    %64 = vset.pattern.permute.xlu0 0
    %65 = vperm.xlu0 %64, %v58
    %v66 = vpop.permute.xlu0 %65
    %69 = vset.pattern.permute.xlu0 0
    %70 = vperm.xlu0 %69, %v59
    %v71 = vpop.permute.xlu0 %70
    %v73 = vsel %vm62, %v66, %v71
    %vm74 = vcmask 15360
    %75 = vst.msk [vmem:[%s3] sm:$0xff] %vm74, %v73
    // Predicated region
    $region18: #{tpu_custom_call.1} parent=1 // pred_check
      _
    $region19: #{tpu_custom_call.1} parent=1 // pred_check_branch
      %77 = sbr.rel (0) target = $region21
    $region20: #{tpu_custom_call.1} parent=1 // pred_region
      _
    $region21: #{tpu_custom_call.1} parent=1 // pred_fallthru
      _
    // Predicated region
    $region22: #{tpu_custom_call.1} parent=1 // pred_check
      _
    $region23: #{tpu_custom_call.1} parent=1 // pred_check_branch
      %79 = sbr.rel (0) target = $region25
    $region24: #{tpu_custom_call.1} parent=1 // pred_region
      _
    $region25: #{tpu_custom_call.1} parent=1 // pred_fallthru
      _
    %80 = vsyncpa [#allocation3], 1

</llo_original>
